<compile_context>
chip_gen: v7x
topology: tpu7x:2x2x1
jax: 0.10.0
libtpu: 0.0.40
codegen_flags: <defaults>
</compile_context>

<pallas_src>
import functools

import jax
import jax.numpy as jnp
from jax.experimental import pallas as pl
from jax.experimental.pallas import tpu as pltpu

LN_EPS = 1e-5


def _layernorm(x, g, b):
    # Always computed in fp32 (matches the fp16-safe LayerNorm subclass in PyTorch).
    mu = jnp.mean(x, axis=-1, keepdims=True)
    var = jnp.mean((x - mu) ** 2, axis=-1, keepdims=True)
    return (x - mu) * jax.lax.rsqrt(var + LN_EPS) * g + b


# ----------------------------------------------------------------------------------
# Kernel 1: patch embedding + CLS token + positional embedding + ln_pre
# ----------------------------------------------------------------------------------
def _embed_kernel(patch_ref, w_ref, cls_ref, pos_ref, g_ref, b_ref, o_ref):
    # patch_ref[0]: (Np, 3*P*P) bf16 ; w_ref: (3*P*P, E) bf16
    emb = jnp.dot(patch_ref[0], w_ref[...], preferred_element_type=jnp.float32)
    tokens = jnp.concatenate([cls_ref[...], emb], axis=0)                # (L, E), CLS first
    tokens = tokens + pos_ref[...]
    o_ref[0] = _layernorm(tokens, g_ref[...], b_ref[...])


def _embed(patches, w_embed, cls_emb, pos_emb, ln_pre_g, ln_pre_b):
    B, Np, Dp = patches.shape
    E = w_embed.shape[1]
    L = Np + 1
    return pl.pallas_call(
        _embed_kernel,
        out_shape=jax.ShapeDtypeStruct((B, L, E), jnp.float32),
        grid=(B,),
        in_specs=[
            pl.BlockSpec((1, Np, Dp), lambda b: (b, 0, 0)),
            pl.BlockSpec((Dp, E), lambda b: (0, 0)),
            pl.BlockSpec((1, E), lambda b: (0, 0)),
            pl.BlockSpec((L, E), lambda b: (0, 0)),
            pl.BlockSpec((1, E), lambda b: (0, 0)),
            pl.BlockSpec((1, E), lambda b: (0, 0)),
        ],
        out_specs=pl.BlockSpec((1, L, E), lambda b: (b, 0, 0)),
        compiler_params=pltpu.CompilerParams(dimension_semantics=("parallel",)),
    )(patches, w_embed, cls_emb, pos_emb, ln_pre_g, ln_pre_b)


# ----------------------------------------------------------------------------------
# Kernel 2: full Transformer stack (ResidualAttentionBlock x layers)
#   grid = (batch_blocks, layers); Bt samples' activations live in a VMEM scratch across
#   the layer axis; per-layer weights (pre-transposed, bf16, QKV fused + scale-folded)
#   and one packed fp32 bias/LN vector are streamed per grid step.
#   Output: only the CLS row per sample.
# ----------------------------------------------------------------------------------
def _transformer_kernel(x_ref, vec_ref, wqkv_ref, wo_ref, wfc_ref, wpr_ref,
                        o_ref, x_scr, *, n_head):
    layer = pl.program_id(1)
    n_layers = pl.num_programs(1)

    @pl.when(layer == 0)
    def _():
        x_scr[...] = x_ref[...]

    Bt, L, E = x_scr.shape
    H = n_head
    dh = E // H
    R = Bt * L

    # Packed per-layer fp32 vectors: [ln1_g, ln1_b, bqkv(3E), bo, ln2_g, ln2_b, bfc(4E), bpr]
    vec = vec_ref[0]                                                     # (1, 13E)
    ln1_g = vec[:, 0:E]
    ln1_b = vec[:, E:2 * E]
    bqkv = vec[:, 2 * E:5 * E]
    bo = vec[:, 5 * E:6 * E]
    ln2_g = vec[:, 6 * E:7 * E]
    ln2_b = vec[:, 7 * E:8 * E]
    bfc = vec[:, 8 * E:12 * E]
    bpr = vec[:, 12 * E:13 * E]

    x = x_scr[...].reshape(R, E)                                         # (Bt*L, E) fp32

    # ---- attention branch: x + out_proj(MHA(ln_1(x))) ----
    xn = _layernorm(x, ln1_g, ln1_b)
    # 1/sqrt(dh) scale already folded into the Q columns of wqkv / bqkv in the wrapper.
    qkv = jnp.dot(xn.astype(jnp.bfloat16), wqkv_ref[0],
                  preferred_element_type=jnp.float32) + bqkv             # (Bt*L, 3E) fp32

    # Split q/k/v (already head-major within each block) and batch over Bt*H heads.
    q = jnp.swapaxes(qkv[:, 0 * E:1 * E].reshape(Bt, L, H, dh), 1, 2).reshape(Bt * H, L, dh)
    k = jnp.swapaxes(qkv[:, 1 * E:2 * E].reshape(Bt, L, H, dh), 1, 2).reshape(Bt * H, L, dh)
    v = jnp.swapaxes(qkv[:, 2 * E:3 * E].reshape(Bt, L, H, dh), 1, 2).reshape(Bt * H, L, dh)

    s = jax.lax.dot_general(
        q.astype(jnp.bfloat16), k.astype(jnp.bfloat16),
        dimension_numbers=(((2,), (2,)), ((0,), (0,))),
        preferred_element_type=jnp.float32)                              # (Bt*H, L, L)
    s = s - jnp.max(s, axis=-1, keepdims=True)
    p = jnp.exp(s)
    p = p * pl.reciprocal(jnp.sum(p, axis=-1, keepdims=True), approx=True)
    ctx = jax.lax.dot_general(
        p.astype(jnp.bfloat16), v.astype(jnp.bfloat16),
        dimension_numbers=(((2,), (1,)), ((0,), (0,))),
        preferred_element_type=jnp.float32)                              # (Bt*H, L, dh)
    ctx = jnp.swapaxes(ctx.reshape(Bt, H, L, dh), 1, 2).reshape(R, E)    # (Bt*L, E)

    attn = jnp.dot(ctx.astype(jnp.bfloat16), wo_ref[0],
                   preferred_element_type=jnp.float32) + bo
    x1 = x + attn

    # ---- MLP branch: x1 + c_proj(QuickGELU(c_fc(ln_2(x1)))) ----
    xn2 = _layernorm(x1, ln2_g, ln2_b)
    hid = jnp.dot(xn2.astype(jnp.bfloat16), wfc_ref[0],
                  preferred_element_type=jnp.float32) + bfc
    hid = hid * jax.nn.sigmoid(1.702 * hid)                              # QuickGELU
    mlp = jnp.dot(hid.astype(jnp.bfloat16), wpr_ref[0],
                  preferred_element_type=jnp.float32) + bpr
    y = (x1 + mlp).reshape(Bt, L, E)

    x_scr[...] = y                                                       # carry to next layer

    @pl.when(layer == n_layers - 1)
    def _():
        o_ref[...] = y[:, 0:1, :]                                        # CLS row only


def _transformer_vmem_limit(Bt, L, E, H):
    weight_bytes = 2 * 2 * 12 * E * E            # bf16 fused weights, double-buffered
    vec_bytes = 2 * 4 * 13 * E
    act_bytes = 3 * 4 * Bt * L * E               # token input (x2 buffers) + carry scratch
    tmp_bytes = 4 * Bt * L * (3 * E + 4 * E + 3 * E) + 4 * Bt * H * L * L
    limit = int(1.3 * (weight_bytes + vec_bytes + act_bytes + tmp_bytes)) + (4 << 20)
    limit = min(max(limit, 32 << 20), 100 << 20)
    try:
        cap = pltpu.get_tpu_info().vmem_capacity_bytes
        limit = min(limit, int(cap * 0.85))
    except Exception:
        pass
    return limit


def _transformer_stack(tokens, vecs, wqkv, wo, wfc, wpr, *, n_head, batch_block):
    B, L, E = tokens.shape
    n_layers = wqkv.shape[0]
    Bt = batch_block
    assert B % Bt == 0

    return pl.pallas_call(
        functools.partial(_transformer_kernel, n_head=n_head),
        out_shape=jax.ShapeDtypeStruct((B, 1, E), jnp.float32),
        grid=(B // Bt, n_layers),
        in_specs=[
            pl.BlockSpec((Bt, L, E), lambda b, l: (b, 0, 0)),            # fetched once / block
            pl.BlockSpec((1, 1, 13 * E), lambda b, l: (l, 0, 0)),        # packed LN/bias vec
            pl.BlockSpec((1, E, 3 * E), lambda b, l: (l, 0, 0)),         # fused QKV weight
            pl.BlockSpec((1, E, E), lambda b, l: (l, 0, 0)),             # out_proj weight
            pl.BlockSpec((1, E, 4 * E), lambda b, l: (l, 0, 0)),         # c_fc weight
            pl.BlockSpec((1, 4 * E, E), lambda b, l: (l, 0, 0)),         # c_proj weight
        ],
        out_specs=pl.BlockSpec((Bt, 1, E), lambda b, l: (b, 0, 0)),
        scratch_shapes=[pltpu.VMEM((Bt, L, E), jnp.float32)],
        compiler_params=pltpu.CompilerParams(
            dimension_semantics=("parallel", "arbitrary"),
            vmem_limit_bytes=_transformer_vmem_limit(Bt, L, E, n_head)),
    )(tokens, vecs, wqkv, wo, wfc, wpr)


# ----------------------------------------------------------------------------------
# Kernel 3: ln_post on CLS token + final projection
# ----------------------------------------------------------------------------------
def _head_kernel(x_ref, g_ref, b_ref, w_ref, o_ref):
    xn = _layernorm(x_ref[...], g_ref[...], b_ref[...])
    o_ref[...] = jnp.dot(xn, w_ref[...], preferred_element_type=jnp.float32)


# ----------------------------------------------------------------------------------
# Wrapper: full VisionTransformer forward
# ----------------------------------------------------------------------------------
def _extract_patches(x_img, patch_size):
    # conv1 (kernel == stride, no bias) as im2col: (B,3,R,R) -> (B, gh*gw, 3*P*P),
    # flattened in (cin, ph, pw) order to match conv1.weight.reshape(width, -1).
    B, C, H, W = x_img.shape
    gh, gw = H // patch_size, W // patch_size
    x = x_img.reshape(B, C, gh, patch_size, gw, patch_size)
    x = x.transpose(0, 2, 4, 1, 3, 5)
    return x.reshape(B, gh * gw, C * patch_size * patch_size)


def _pick_batch_block(B, target):
    bt = max(1, min(B, target))
    while B % bt:
        bt -= 1
    return bt


def _prepare_stacked_params(layer_params, n_head):
    E = layer_params[0]["ln1_g"].shape[0]
    dh = E // n_head
    scale = dh ** -0.5

    def qkv_w(p):
        w = p["in_proj_w"]                                               # (3E, E) torch layout
        w = jnp.concatenate([w[:E] * scale, w[E:]], axis=0)              # fold attn scale into Q
        return w.T.astype(jnp.bfloat16)                                  # (E, 3E)

    def packed_vec(p):
        b = p["in_proj_b"]
        bqkv = jnp.concatenate([b[:E] * scale, b[E:]], axis=0)           # fold scale into Q bias
        return jnp.concatenate([
            p["ln1_g"], p["ln1_b"], bqkv, p["out_proj_b"],
            p["ln2_g"], p["ln2_b"], p["c_fc_b"], p["c_proj_b"],
        ]).reshape(1, 13 * E).astype(jnp.float32)

    def stack(fn):
        return jnp.stack([fn(p) for p in layer_params], axis=0)

    vecs = stack(packed_vec)                                             # (layers, 1, 13E)
    wqkv = stack(qkv_w)                                                  # (layers, E, 3E)
    wo = stack(lambda p: p["out_proj_w"].T.astype(jnp.bfloat16))         # (layers, E, E)
    wfc = stack(lambda p: p["c_fc_w"].T.astype(jnp.bfloat16))            # (layers, E, 4E)
    wpr = stack(lambda p: p["c_proj_w"].T.astype(jnp.bfloat16))          # (layers, 4E, E)
    return vecs, wqkv, wo, wfc, wpr


def vit_forward(x_img, params, *, patch_size, n_head, batch_block=4):
    E = params["class_embedding"].shape[0]
    B = x_img.shape[0]
    Bt = _pick_batch_block(B, batch_block)

    patches = _extract_patches(x_img, patch_size).astype(jnp.bfloat16)   # (B, Np, 3*P*P)
    w_embed = params["conv1_w"].reshape(E, -1).T.astype(jnp.bfloat16)    # (3*P*P, E)

    tokens = _embed(patches, w_embed,
                    params["class_embedding"].reshape(1, E),
                    params["positional_embedding"],
                    params["ln_pre_g"].reshape(1, E),
                    params["ln_pre_b"].reshape(1, E))                    # (B, L, E) fp32

    vecs, wqkv, wo, wfc, wpr = _prepare_stacked_params(params["layers"], n_head)
    cls_tok = _transformer_stack(tokens, vecs, wqkv, wo, wfc, wpr,
                                 n_head=n_head, batch_block=Bt)          # (B, 1, E) CLS only
    cls_feat = cls_tok.reshape(B, E)

    out = pl.pallas_call(
        _head_kernel,
        out_shape=jax.ShapeDtypeStruct((B, params["proj"].shape[1]), jnp.float32),
    )(cls_feat, params["ln_post_g"].reshape(1, E),
      params["ln_post_b"].reshape(1, E), params["proj"])
    return out


# ----------------------------------------------------------------------------------
# Pure-JAX fp32 reference (mirrors PyTorch semantics) + params
# ----------------------------------------------------------------------------------
def _ln_ref(x, g, b):
    mu = x.mean(axis=-1, keepdims=True)
    var = ((x - mu) ** 2).mean(axis=-1, keepdims=True)
    return (x - mu) / jnp.sqrt(var + LN_EPS) * g + b


def _block_ref(x, p, n_head):
    B, L, E = x.shape
    dh = E // n_head
    xn = _ln_ref(x, p["ln1_g"], p["ln1_b"])
    qkv = xn @ p["in_proj_w"].T + p["in_proj_b"]
    q, k, v = qkv[..., :E], qkv[..., E:2 * E], qkv[..., 2 * E:]

    def split(t):
        return t.reshape(B, L, n_head, dh).transpose(0, 2, 1, 3)

    q, k, v = split(q) / (dh ** 0.5), split(k), split(v)
    a = jax.nn.softmax(q @ jnp.swapaxes(k, -1, -2), axis=-1)
    o = (a @ v).transpose(0, 2, 1, 3).reshape(B, L, E)
    x = x + (o @ p["out_proj_w"].T + p["out_proj_b"])
    xn2 = _ln_ref(x, p["ln2_g"], p["ln2_b"])
    hid = xn2 @ p["c_fc_w"].T + p["c_fc_b"]
    hid = hid * jax.nn.sigmoid(1.702 * hid)
    return x + (hid @ p["c_proj_w"].T + p["c_proj_b"])


def vit_reference(x_img, params, *, patch_size, n_head):
    E = params["class_embedding"].shape[0]
    patches = _extract_patches(x_img, patch_size)
    emb = patches @ params["conv1_w"].reshape(E, -1).T
    B = emb.shape[0]
    cls = jnp.broadcast_to(params["class_embedding"][None, None, :], (B, 1, E))
    x = jnp.concatenate([cls, emb], axis=1) + params["positional_embedding"][None]
    x = _ln_ref(x, params["ln_pre_g"], params["ln_pre_b"])
    for p in params["layers"]:
        x = _block_ref(x, p, n_head)
    x = _ln_ref(x[:, 0, :], params["ln_post_g"], params["ln_post_b"])
    return x @ params["proj"]


def make_vit_params(key, *, input_resolution, patch_size, width, layers, heads, output_dim):
    E = width
    L = (input_resolution // patch_size) ** 2 + 1
    emb_scale = E ** -0.5
    proj_std = E ** -0.5
    fc_std = (2 * E) ** -0.5
    keys = iter(jax.random.split(key, 4 + 6 * layers))

    def nrm(shape, std):
        return std * jax.random.normal(next(keys), shape, jnp.float32)

    layer_params = []
    for _ in range(layers):
        layer_params.append(dict(
            ln1_g=jnp.ones((E,), jnp.float32), ln1_b=jnp.zeros((E,), jnp.float32),
            in_proj_w=nrm((3 * E, E), proj_std),
            in_proj_b=nrm((3 * E,), 0.02),
            out_proj_w=nrm((E, E), proj_std),
            out_proj_b=jnp.zeros((E,), jnp.float32),
            ln2_g=jnp.ones((E,), jnp.float32), ln2_b=jnp.zeros((E,), jnp.float32),
            c_fc_w=nrm((4 * E, E), proj_std),
            c_fc_b=nrm((4 * E,), 0.02),
            c_proj_w=nrm((E, 4 * E), fc_std),
            c_proj_b=jnp.zeros((E,), jnp.float32),
        ))
    return dict(
        conv1_w=nrm((E, 3, patch_size, patch_size), 0.05),
        class_embedding=nrm((E,), emb_scale),
        positional_embedding=nrm((L, E), emb_scale),
        ln_pre_g=jnp.ones((E,), jnp.float32), ln_pre_b=jnp.zeros((E,), jnp.float32),
        layers=layer_params,
        ln_post_g=jnp.ones((E,), jnp.float32), ln_post_b=jnp.zeros((E,), jnp.float32),
        proj=nrm((E, output_dim), emb_scale),
    )


if __name__ == "__main__":
    INPUT_RES, PATCH, WIDTH, LAYERS, HEADS, OUT_DIM = 16, 4, 32, 2, 4, 16
    BATCH = 4            # exercises two batch blocks with batch_block=2

    key = jax.random.PRNGKey(0)
    kx, kp = jax.random.split(key)
    x_img = jax.random.normal(kx, (BATCH, 3, INPUT_RES, INPUT_RES), jnp.float32)
    params = make_vit_params(kp, input_resolution=INPUT_RES, patch_size=PATCH,
                             width=WIDTH, layers=LAYERS, heads=HEADS,
                             output_dim=OUT_DIM)

    out = vit_forward(x_img, params, patch_size=PATCH, n_head=HEADS, batch_block=2)
    out = jax.block_until_ready(out)

    ref = vit_reference(x_img, params, patch_size=PATCH, n_head=HEADS)
    assert out.shape == (BATCH, OUT_DIM)
    # bf16 matmul operands / approx-reciprocal softmax vs fp32 reference -> loose tol.
    rel_err = float(jnp.max(jnp.abs(out - ref)) / (jnp.max(jnp.abs(ref)) + 1e-6))
    assert rel_err < 8e-2, f"mismatch vs reference: rel err {rel_err}"

    print("KERNEL_OK")
</pallas_src>

<mosaic_0001>
module attributes {stable_mosaic.version = 11 : i64} {
  func.func @_embed_kernel(%arg0: i32, %arg1: memref<1x16x48xbf16, #tpu.memory_space<vmem>>, %arg2: memref<48x32xbf16, #tpu.memory_space<vmem>>, %arg3: memref<1x32xf32, #tpu.memory_space<vmem>>, %arg4: memref<17x32xf32, #tpu.memory_space<vmem>>, %arg5: memref<1x32xf32, #tpu.memory_space<vmem>>, %arg6: memref<1x32xf32, #tpu.memory_space<vmem>>, %arg7: memref<1x17x32xf32, #tpu.memory_space<vmem>>) attributes {dimension_semantics = [#tpu.dimension_semantics<parallel>], iteration_bounds = array<i64: 4>, scalar_prefetch = 0 : i64, scratch_operands = 0 : i64, tpu.core_type = #tpu.core_type<tc>, window_params = [{transform_indices = @transform_0, window_bounds = array<i64: 1, 16, 48>}, {pipeline_mode = #tpu.pipeline_mode<synchronous>, transform_indices = @transform_1, window_bounds = array<i64: 48, 32>}, {pipeline_mode = #tpu.pipeline_mode<synchronous>, transform_indices = @transform_2, window_bounds = array<i64: 1, 32>}, {pipeline_mode = #tpu.pipeline_mode<synchronous>, transform_indices = @transform_3, window_bounds = array<i64: 17, 32>}, {pipeline_mode = #tpu.pipeline_mode<synchronous>, transform_indices = @transform_4, window_bounds = array<i64: 1, 32>}, {pipeline_mode = #tpu.pipeline_mode<synchronous>, transform_indices = @transform_5, window_bounds = array<i64: 1, 32>}, {transform_indices = @transform_6, window_bounds = array<i64: 1, 17, 32>}]} {
    %c0 = arith.constant 0 : index
    %c0_0 = arith.constant 0 : index
    %c0_1 = arith.constant 0 : index
    %0 = vector.load %arg1[%c0, %c0_0, %c0_1] : memref<1x16x48xbf16, #tpu.memory_space<vmem>>, vector<1x16x48xbf16>
    %1 = vector.shape_cast %0 : vector<1x16x48xbf16> to vector<16x48xbf16>
    %c0_2 = arith.constant 0 : index
    %c0_3 = arith.constant 0 : index
    %2 = vector.load %arg2[%c0_2, %c0_3] : memref<48x32xbf16, #tpu.memory_space<vmem>>, vector<48x32xbf16>
    %cst = arith.constant dense<0.000000e+00> : vector<16x32xf32>
    %3 = tpu.matmul %1, %2, %cst {dimension_numbers = #tpu.dot_dimension_numbers<[1], [0], [0], [1], [0, 0, 1, 1], [], []>} : vector<16x48xbf16>, vector<48x32xbf16>, vector<16x32xf32> -> vector<16x32xf32>
    %c0_4 = arith.constant 0 : index
    %c0_5 = arith.constant 0 : index
    %4 = vector.load %arg3[%c0_4, %c0_5] : memref<1x32xf32, #tpu.memory_space<vmem>>, vector<1x32xf32>
    %5 = tpu.concatenate %4, %3 in 0 : vector<1x32xf32>, vector<16x32xf32> -> vector<17x32xf32>
    %c0_6 = arith.constant 0 : index
    %c0_7 = arith.constant 0 : index
    %6 = vector.load %arg4[%c0_6, %c0_7] : memref<17x32xf32, #tpu.memory_space<vmem>>, vector<17x32xf32>
    %7 = arith.addf %5, %6 : vector<17x32xf32>
    %c0_8 = arith.constant 0 : index
    %c0_9 = arith.constant 0 : index
    %8 = vector.load %arg5[%c0_8, %c0_9] : memref<1x32xf32, #tpu.memory_space<vmem>>, vector<1x32xf32>
    %c0_10 = arith.constant 0 : index
    %c0_11 = arith.constant 0 : index
    %9 = vector.load %arg6[%c0_10, %c0_11] : memref<1x32xf32, #tpu.memory_space<vmem>>, vector<1x32xf32>
    %cst_12 = arith.constant dense<0.000000e+00> : vector<17xf32>
    %10 = vector.multi_reduction <add>, %7, %cst_12 [1] : vector<17x32xf32> to vector<17xf32>
    %11 = vector.shape_cast %10 : vector<17xf32> to vector<17x1xf32>
    %cst_13 = arith.constant 3.200000e+01 : f32
    %12 = vector.broadcast %cst_13 : f32 to vector<17x1xf32>
    %13 = arith.divf %11, %12 : vector<17x1xf32>
    %14 = vector.broadcast %13 : vector<17x1xf32> to vector<17x32xf32>
    %15 = arith.subf %7, %14 : vector<17x32xf32>
    %16 = arith.mulf %15, %15 : vector<17x32xf32>
    %cst_14 = arith.constant dense<0.000000e+00> : vector<17xf32>
    %17 = vector.multi_reduction <add>, %16, %cst_14 [1] : vector<17x32xf32> to vector<17xf32>
    %18 = vector.shape_cast %17 : vector<17xf32> to vector<17x1xf32>
    %cst_15 = arith.constant 3.200000e+01 : f32
    %19 = vector.broadcast %cst_15 : f32 to vector<17x1xf32>
    %20 = arith.divf %18, %19 : vector<17x1xf32>
    %21 = vector.broadcast %13 : vector<17x1xf32> to vector<17x32xf32>
    %22 = arith.subf %7, %21 : vector<17x32xf32>
    %cst_16 = arith.constant 9.99999974E-6 : f32
    %23 = vector.broadcast %cst_16 : f32 to vector<17x1xf32>
    %24 = arith.addf %20, %23 : vector<17x1xf32>
    %25 = math.rsqrt %24 : vector<17x1xf32>
    %26 = vector.broadcast %25 : vector<17x1xf32> to vector<17x32xf32>
    %27 = arith.mulf %22, %26 : vector<17x32xf32>
    %28 = vector.broadcast %8 : vector<1x32xf32> to vector<17x32xf32>
    %29 = arith.mulf %27, %28 : vector<17x32xf32>
    %30 = vector.broadcast %9 : vector<1x32xf32> to vector<17x32xf32>
    %31 = arith.addf %29, %30 : vector<17x32xf32>
    %c0_17 = arith.constant 0 : index
    %c0_18 = arith.constant 0 : index
    %c0_19 = arith.constant 0 : index
    %32 = vector.load %arg7[%c0_17, %c0_18, %c0_19] : memref<1x17x32xf32, #tpu.memory_space<vmem>>, vector<1x17x32xf32>
    %33 = vector.shape_cast %32 : vector<1x17x32xf32> to vector<17x32xf32>
    %34 = vector.shape_cast %31 : vector<17x32xf32> to vector<1x17x32xf32>
    tpu.vector_store %arg7[%c0_17, %c0_18, %c0_19], %34 {strides = array<i32>} : memref<1x17x32xf32, #tpu.memory_space<vmem>>, vector<1x17x32xf32>,
    return
  }
  func.func @transform_0(%arg0: i32) -> (i32, i32, i32) {
    %c0_i32 = arith.constant 0 : i32
    %c0_i32_0 = arith.constant 0 : i32
    %c0_i32_1 = arith.constant 0 : i32
    return %arg0, %c0_i32, %c0_i32_0 : i32, i32, i32
  }
  func.func @transform_1(%arg0: i32) -> (i32, i32) {
    %c0_i32 = arith.constant 0 : i32
    %c0_i32_0 = arith.constant 0 : i32
    %c0_i32_1 = arith.constant 0 : i32
    return %c0_i32, %c0_i32_0 : i32, i32
  }
  func.func @transform_2(%arg0: i32) -> (i32, i32) {
    %c0_i32 = arith.constant 0 : i32
    %c0_i32_0 = arith.constant 0 : i32
    %c0_i32_1 = arith.constant 0 : i32
    return %c0_i32, %c0_i32_0 : i32, i32
  }
  func.func @transform_3(%arg0: i32) -> (i32, i32) {
    %c0_i32 = arith.constant 0 : i32
    %c0_i32_0 = arith.constant 0 : i32
    %c0_i32_1 = arith.constant 0 : i32
    return %c0_i32, %c0_i32_0 : i32, i32
  }
  func.func @transform_4(%arg0: i32) -> (i32, i32) {
    %c0_i32 = arith.constant 0 : i32
    %c0_i32_0 = arith.constant 0 : i32
    %c0_i32_1 = arith.constant 0 : i32
    return %c0_i32, %c0_i32_0 : i32, i32
  }
  func.func @transform_5(%arg0: i32) -> (i32, i32) {
    %c0_i32 = arith.constant 0 : i32
    %c0_i32_0 = arith.constant 0 : i32
    %c0_i32_1 = arith.constant 0 : i32
    return %c0_i32, %c0_i32_0 : i32, i32
  }
  func.func @transform_6(%arg0: i32) -> (i32, i32, i32) {
    %c0_i32 = arith.constant 0 : i32
    %c0_i32_0 = arith.constant 0 : i32
    %c0_i32_1 = arith.constant 0 : i32
    return %arg0, %c0_i32, %c0_i32_0 : i32, i32, i32
  }
}

</mosaic_0001>

<llo_original>
// kernel: tpu_custom_call.1
$region0: #{tpu_custom_call.1}
  #allocation0 [shape = 'u32[]', space=smem, size = 0x4, offset = 0x4, fixed_abs, tag = 'smem constant byte address 0x4 - core index']
  #allocation1 [shape = 'u32[144,128]{1,0:T(1,128)}', space=vmem, size = 0x12000, scoped, tag = 'internal scratch']
  %s0 = inlined_call_operand.vmem [shape: bf16[4,16,48], index: 0, kind: input, shape index: {}]
  %s1 = inlined_call_operand.vmem [shape: bf16[48,32], index: 1, kind: input, shape index: {}]
  %s2 = inlined_call_operand.vmem [shape: f32[1,32], index: 2, kind: input, shape index: {}]
  %s3 = inlined_call_operand.hbm [shape: f32[17,32], index: 3, kind: input, shape index: {}]
  %s4 = inlined_call_operand.vmem [shape: f32[1,32], index: 4, kind: input, shape index: {}]
  %s5 = inlined_call_operand.vmem [shape: f32[1,32], index: 5, kind: input, shape index: {}]
  %s6 = inlined_call_operand.vmem [shape: f32[4,17,32], index: 6, kind: output, shape index: {}]
  %s7 = sld [smem:[#allocation0]]
  $region61: #{tpu_custom_call.1} parent=0
    _
  %s9 = ssub.s32 1, %s7
  %s10 = scalar_select 0, %s9, %s7
  $region1: #{tpu_custom_call.1} parent=0
    #allocation2 [shape = 'u8[12288]{0}', space=vmem, size = 0x3000, scoped, tag = 'input window, operand 3, single buffered']
    #allocation3 [shape = 's32[2]{0}', space=sflag, size = 0x8, scoped, tag = 'scoped memory for tpu_custom_call.1']
    %11 = vsyncpa [#allocation3], 0
    loop: start=0, step=1, limit=6
    $region2: #{tpu_custom_call.1} parent=1 // loop_pre_header
      _
    $region3: #{tpu_custom_call.1} parent=1 // loop_header
      %s13 = sphi 0, %s17
      %p14 = scmp.ge.s32.totalorder %s13, 6
      %s23 = sphi 0, %s25
      %s26 = sphi 0, %s23
      %s27 = sphi 0, %s26
      %s43 = sphi 0, %s27
      %s47 = sphi 0, %s47
      %s49 = sphi 0, %s47
      %s50 = sphi 0, %s49
      %s64 = sphi 0, %s50
      %s68 = sphi 0, %s68
      %s70 = sphi 0, %s68
      %s71 = sphi 0, %s70
      %s85 = sphi 0, %s71
      %s89 = sphi 0, %s89
      %s91 = sphi 0, %s89
      %s92 = sphi 0, %s91
      %s106 = sphi 0, %s92
      %s110 = sphi 0, %s110
      %s112 = sphi 0, %s110
      %s113 = sphi 0, %s112
      %s127 = sphi 0, %s113
      %s131 = sphi 0, %s131
      %s133 = sphi 0, %s131
      %s134 = sphi 0, %s133
      %s148 = sphi 0, %s134
      %s154 = sphi 0, %s156
      %s157 = sphi 0, %s154
      %s158 = sphi 0, %s157
      %s174 = sphi 0, %s158
    $region4: #{tpu_custom_call.1} parent=1 // loop_header_branch
      %16 = sbr.rel (%p14) target = $region8
    $region5: #{tpu_custom_call.1} parent=1 // loop_body
      %s18 = ssub.s32 %s13, 1
      %s19 = ssub.s32 %s13, 2
      %s20 = sadd.s32 %s13, 1
      %s21 = ssub.s32 %s13, %s20
      %p22 = scmp.eq.s32.totalorder %s21, 0
      %s24 = sadd.s32 %s23, 1
      %s25 = scalar_select %p22, %s23, %s24
      %p28 = pneg %p22
      %p29 = scmp.eq.s32.totalorder %s13, 3
      %p30 = por %p28, %p29
      %p31 = scmp.ne.s32.totalorder %s23, %s26
      %p32 = scmp.eq.s32.totalorder %s13, 0
      %p33 = por %p31, %p32
      %p34 = scmp.ne.s32.totalorder %s23, %s26
      %p35 = scmp.eq.s32.totalorder %s18, 3
      %p36 = por %p34, %p35
      %p37 = scmp.ne.s32.totalorder %s26, %s27
      %p38 = scmp.eq.s32.totalorder %s18, 0
      %p39 = por %p37, %p38
      %p40 = scmp.ne.s32.totalorder %s26, %s27
      %p41 = scmp.eq.s32.totalorder %s19, 3
      %p42 = por %p40, %p41
      %p44 = scmp.ne.s32.totalorder %s27, %s43
      %p45 = scmp.eq.s32.totalorder %s19, 0
      %p46 = por %p44, %p45
      %s48 = sadd.s32 %s47, 1
      %p51 = scmp.eq.s32.totalorder %s13, 3
      %p52 = scmp.ne.s32.totalorder %s47, %s49
      %p53 = scmp.eq.s32.totalorder %s13, 0
      %p54 = por %p52, %p53
      %p55 = scmp.ne.s32.totalorder %s47, %s49
      %p56 = scmp.eq.s32.totalorder %s18, 3
      %p57 = por %p55, %p56
      %p58 = scmp.ne.s32.totalorder %s49, %s50
      %p59 = scmp.eq.s32.totalorder %s18, 0
      %p60 = por %p58, %p59
      %p61 = scmp.ne.s32.totalorder %s49, %s50
      %p62 = scmp.eq.s32.totalorder %s19, 3
      %p63 = por %p61, %p62
      %p65 = scmp.ne.s32.totalorder %s50, %s64
      %p66 = scmp.eq.s32.totalorder %s19, 0
      %p67 = por %p65, %p66
      %s69 = sadd.s32 %s68, 1
      %p72 = scmp.eq.s32.totalorder %s13, 3
      %p73 = scmp.ne.s32.totalorder %s68, %s70
      %p74 = scmp.eq.s32.totalorder %s13, 0
      %p75 = por %p73, %p74
      %p76 = scmp.ne.s32.totalorder %s68, %s70
      %p77 = scmp.eq.s32.totalorder %s18, 3
      %p78 = por %p76, %p77
      %p79 = scmp.ne.s32.totalorder %s70, %s71
      %p80 = scmp.eq.s32.totalorder %s18, 0
      %p81 = por %p79, %p80
      %p82 = scmp.ne.s32.totalorder %s70, %s71
      %p83 = scmp.eq.s32.totalorder %s19, 3
      %p84 = por %p82, %p83
      %p86 = scmp.ne.s32.totalorder %s71, %s85
      %p87 = scmp.eq.s32.totalorder %s19, 0
      %p88 = por %p86, %p87
      %s90 = sadd.s32 %s89, 1
      %p93 = scmp.eq.s32.totalorder %s13, 3
      %p94 = scmp.ne.s32.totalorder %s89, %s91
      %p95 = scmp.eq.s32.totalorder %s13, 0
      %p96 = por %p94, %p95
      %p97 = scmp.ne.s32.totalorder %s89, %s91
      %p98 = scmp.eq.s32.totalorder %s18, 3
      %p99 = por %p97, %p98
      %p100 = scmp.ne.s32.totalorder %s91, %s92
      %p101 = scmp.eq.s32.totalorder %s18, 0
      %p102 = por %p100, %p101
      %p103 = scmp.ne.s32.totalorder %s91, %s92
      %p104 = scmp.eq.s32.totalorder %s19, 3
      %p105 = por %p103, %p104
      %p107 = scmp.ne.s32.totalorder %s92, %s106
      %p108 = scmp.eq.s32.totalorder %s19, 0
      %p109 = por %p107, %p108
      %s111 = sadd.s32 %s110, 1
      %p114 = scmp.eq.s32.totalorder %s13, 3
      %p115 = scmp.ne.s32.totalorder %s110, %s112
      %p116 = scmp.eq.s32.totalorder %s13, 0
      %p117 = por %p115, %p116
      %p118 = scmp.ne.s32.totalorder %s110, %s112
      %p119 = scmp.eq.s32.totalorder %s18, 3
      %p120 = por %p118, %p119
      %p121 = scmp.ne.s32.totalorder %s112, %s113
      %p122 = scmp.eq.s32.totalorder %s18, 0
      %p123 = por %p121, %p122
      %p124 = scmp.ne.s32.totalorder %s112, %s113
      %p125 = scmp.eq.s32.totalorder %s19, 3
      %p126 = por %p124, %p125
      %p128 = scmp.ne.s32.totalorder %s113, %s127
      %p129 = scmp.eq.s32.totalorder %s19, 0
      %p130 = por %p128, %p129
      %s132 = sadd.s32 %s131, 1
      %p135 = scmp.eq.s32.totalorder %s13, 3
      %p136 = scmp.ne.s32.totalorder %s131, %s133
      %p137 = scmp.eq.s32.totalorder %s13, 0
      %p138 = por %p136, %p137
      %p139 = scmp.ne.s32.totalorder %s131, %s133
      %p140 = scmp.eq.s32.totalorder %s18, 3
      %p141 = por %p139, %p140
      %p142 = scmp.ne.s32.totalorder %s133, %s134
      %p143 = scmp.eq.s32.totalorder %s18, 0
      %p144 = por %p142, %p143
      %p145 = scmp.ne.s32.totalorder %s133, %s134
      %p146 = scmp.eq.s32.totalorder %s19, 3
      %p147 = por %p145, %p146
      %p149 = scmp.ne.s32.totalorder %s134, %s148
      %p150 = scmp.eq.s32.totalorder %s19, 0
      %p151 = por %p149, %p150
      %s152 = ssub.s32 %s13, %s20
      %p153 = scmp.eq.s32.totalorder %s152, 0
      %s155 = sadd.s32 %s154, 1
      %s156 = scalar_select %p153, %s154, %s155
      %p159 = pneg %p153
      %p160 = scmp.eq.s32.totalorder %s13, 3
      %p161 = por %p159, %p160
      %p162 = scmp.ne.s32.totalorder %s154, %s157
      %p163 = scmp.eq.s32.totalorder %s13, 0
      %p164 = por %p162, %p163
      %p165 = scmp.ne.s32.totalorder %s154, %s157
      %p166 = scmp.eq.s32.totalorder %s18, 3
      %p167 = por %p165, %p166
      %p168 = scmp.ne.s32.totalorder %s157, %s158
      %p169 = scmp.eq.s32.totalorder %s18, 0
      %p170 = por %p168, %p169
      %p171 = scmp.ne.s32.totalorder %s157, %s158
      %p172 = scmp.eq.s32.totalorder %s19, 3
      %p173 = por %p171, %p172
      %p175 = scmp.ne.s32.totalorder %s158, %s174
      %p176 = scmp.eq.s32.totalorder %s19, 0
      %p177 = por %p175, %p176
      %p178 = scmp.le.s32.totalorder 1, %s13
      %p179 = scmp.lt.s32.totalorder %s13, 5
      %p180 = pnand %p178, %p179
      %p181 = pneg %p180
      // Predicated region
      $region9: #{tpu_custom_call.1} parent=5 // pred_check
        _
      $region10: #{tpu_custom_call.1} parent=5 // pred_check_branch
        %183 = sbr.rel (%p180) target = $region12
      $region11: #{tpu_custom_call.1} parent=5 // pred_region
        %s184 = ssub.s32 %s13, 1
        // Predicated region
        $region13: #{tpu_custom_call.1} parent=11 // pred_check
          %p185 = pneg %p60
        $region14: #{tpu_custom_call.1} parent=11 // pred_check_branch
          %187 = sbr.rel (%p185) target = $region16
        $region15: #{tpu_custom_call.1} parent=11 // pred_region
          _
        $region16: #{tpu_custom_call.1} parent=11 // pred_fallthru
          _
        // Predicated region
        $region17: #{tpu_custom_call.1} parent=11 // pred_check
          %p188 = pneg %p81
        $region18: #{tpu_custom_call.1} parent=11 // pred_check_branch
          %190 = sbr.rel (%p188) target = $region20
        $region19: #{tpu_custom_call.1} parent=11 // pred_region
          _
        $region20: #{tpu_custom_call.1} parent=11 // pred_fallthru
          _
        // Predicated region
        $region21: #{tpu_custom_call.1} parent=11 // pred_check
          %p191 = pneg %p102
        $region22: #{tpu_custom_call.1} parent=11 // pred_check_branch
          %193 = sbr.rel (%p191) target = $region24
        $region23: #{tpu_custom_call.1} parent=11 // pred_region
          %s195 = ssub.s32 384, 384
          %196 = vsyncadd [#allocation3], %s195
          %s197 = sshll.u32 [#allocation2], 4
          %s198 = int_to_ptr.vmem [resolvable:$true] %s197
          %203 = dma.hbm_to_vmem [thread:$0]  %s3, 384, %s198, [#allocation3], 128, 128, 8
        $region24: #{tpu_custom_call.1} parent=11 // pred_fallthru
          _
        // Predicated region
        $region25: #{tpu_custom_call.1} parent=11 // pred_check
          %p204 = pneg %p123
        $region26: #{tpu_custom_call.1} parent=11 // pred_check_branch
          %206 = sbr.rel (%p204) target = $region28
        $region27: #{tpu_custom_call.1} parent=11 // pred_region
          _
        $region28: #{tpu_custom_call.1} parent=11 // pred_fallthru
          _
        // Predicated region
        $region29: #{tpu_custom_call.1} parent=11 // pred_check
          %p207 = pneg %p144
        $region30: #{tpu_custom_call.1} parent=11 // pred_check_branch
          %209 = sbr.rel (%p207) target = $region32
        $region31: #{tpu_custom_call.1} parent=11 // pred_region
          _
        $region32: #{tpu_custom_call.1} parent=11 // pred_fallthru
          _
      $region12: #{tpu_custom_call.1} parent=5 // pred_fallthru
        _
      %p210 = scmp.lt.s32.totalorder %s13, 4
      // Predicated region
      $region33: #{tpu_custom_call.1} parent=5 // pred_check
        %p211 = pneg %p210
      $region34: #{tpu_custom_call.1} parent=5 // pred_check_branch
        %213 = sbr.rel (%p211) target = $region36
      $region35: #{tpu_custom_call.1} parent=5 // pred_region
        // Predicated region
        $region37: #{tpu_custom_call.1} parent=35 // pred_check
          %p214 = pneg %p33
        $region38: #{tpu_custom_call.1} parent=35 // pred_check_branch
          %216 = sbr.rel (%p214) target = $region40
        $region39: #{tpu_custom_call.1} parent=35 // pred_region
          %p217 = scmp.lt.s32.totalorder %s13, 3
          %s218 = scalar_select %p217, %s13, 3
          %s219 = smul.addr %s218, 2
          %s220 = smul.addr %s219, 4
          %s221 = scalar_lea.vmem %s0, %s220
        $region40: #{tpu_custom_call.1} parent=35 // pred_fallthru
          _
      $region36: #{tpu_custom_call.1} parent=5 // pred_fallthru
        _
      %p222 = scmp.le.s32.totalorder 1, %s13
      %p223 = scmp.lt.s32.totalorder %s13, 5
      %p224 = pnand %p222, %p223
      %p225 = pneg %p224
      // Predicated region
      $region41: #{tpu_custom_call.1} parent=5 // pred_check
        _
      $region42: #{tpu_custom_call.1} parent=5 // pred_check_branch
        %227 = sbr.rel (%p224) target = $region44
      $region43: #{tpu_custom_call.1} parent=5 // pred_region
        %s228 = ssub.s32 %s13, 1
        // Predicated region
        $region45: #{tpu_custom_call.1} parent=43 // pred_check
          %p229 = pneg %p102
        $region46: #{tpu_custom_call.1} parent=43 // pred_check_branch
          %231 = sbr.rel (%p229) target = $region48
        $region47: #{tpu_custom_call.1} parent=43 // pred_region
          %232 = dma.done [#allocation3], 384
        $region48: #{tpu_custom_call.1} parent=43 // pred_fallthru
          _
        %p233 = scmp.lt.s32.totalorder %s18, 3
        %s234 = scalar_select %p233, %s18, 3
        %s235 = smul.addr %s234, 2
        %s236 = smul.addr %s235, 4
        %s237 = scalar_lea.vmem %s0, %s236
        %p238 = pneg %p39
        %p239 = pneg %p36
        %p240 = pneg %p60
        %p241 = pneg %p57
        %p242 = pneg %p81
        %p243 = pneg %p78
        %p244 = pneg %p102
        %p245 = pneg %p99
        %p246 = pneg %p123
        %p247 = pneg %p120
        %p248 = pneg %p144
        %p249 = pneg %p141
        %p250 = pneg %p170
        %p251 = pneg %p167
        %p252 = scmp.lt.s32.totalorder %s18, 3
        %s253 = scalar_select %p252, %s18, 3
        %s254 = smul.addr %s253, 3
        %s255 = smul.addr %s254, 8
        %s256 = scalar_lea.vmem %s6, %s255
        %p257 = scmp.lt.s32.totalorder %s18, 3
        %s258 = scalar_select %p257, %s18, 3
        %s259 = smul.addr %s258, 2
        %s260 = smul.addr %s259, 4
        %s261 = scalar_lea.vmem %s0, %s260
        %p262 = scmp.lt.s32.totalorder %s18, 3
        %s263 = scalar_select %p262, %s18, 3
        %s264 = smul.addr %s263, 3
        %s265 = smul.addr %s264, 8
        %s266 = scalar_lea.vmem %s6, %s265
        %v268 = vld [vmem:[%s261] sm:$0xf]
        %v269 = vld [vmem:[%s261 + $0x4] sm:$0xf]
        %v270 = vld [vmem:[%s1] sm:$0xf]
        %v271 = vld [vmem:[%s1 + $0x4] sm:$0xf]
        %v272 = vld [vmem:[%s1 + $0x8] sm:$0xf]
        %v273 = vld [vmem:[%s1 + $0xc] sm:$0xf]
        %v274 = vld [vmem:[%s1 + $0x10] sm:$0xf]
        %v275 = vld [vmem:[%s1 + $0x14] sm:$0xf]
        %v278 = vunpack.c.l.b16 %v268
        %v279 = vunpack.c.l.b16 %v269
        %v280 = vpack.c.b16 %v279, %v278
        %v287 = vunpack.c.l.b16 %v270
        %v288 = vunpack.c.l.b16 %v271
        %v289 = vunpack.c.l.b16 %v272
        %v290 = vunpack.c.l.b16 %v273
        %v291 = vunpack.c.l.b16 %v274
        %v292 = vunpack.c.l.b16 %v275
        %v293 = vpack.c.b16 %v288, %v287
        %v294 = vpack.c.b16 %v290, %v289
        %v295 = vpack.c.b16 %v292, %v291
        %vm299 = vcmask 392192
        %v301 = vsel %vm299, %v280, 0
        %303 = vmatprep.subr.bf16.mxu0 0
        %304 = vmatpush1.bf16.msra.mxu0 %v293
        %305 = vmatprep.subr.bf16.mxu0 0
        %306 = vmatpush1.bf16.msra.mxu0 %v294
        %307 = vmatprep.subr.bf16.mxu0 0
        %308 = vmatpush1.bf16.msra.mxu0 %v295
        %309 = vmatprep.subr.bf16.mxu0 0
        %310 = vmatpush1.bf16.msra.mxu0 0
        %311 = vmatprep.subr.bf16.mxu0 0
        %312 = vmatpush1.bf16.msra.mxu0 0
        %313 = vmatprep.subr.bf16.mxu0 0
        %314 = vmatpush1.bf16.msra.mxu0 0
        %315 = vmatprep.subr.bf16.mxu0 0
        %316 = vmatpush1.bf16.msra.mxu0 0
        %317 = vmatprep.subr.bf16.mxu0 0
        %318 = vmatpush1.bf16.msra.mxu0 0
        %319 = vmatprep.subr.bf16.mxu0 0
        %320 = vmatpush1.bf16.msra.mxu0 0
        %321 = vmatprep.subr.bf16.mxu0 0
        %322 = vmatpush1.bf16.msra.mxu0 0
        %323 = vmatprep.subr.bf16.mxu0 0
        %324 = vmatpush1.bf16.msra.mxu0 0
        %325 = vmatprep.subr.bf16.mxu0 0
        %326 = vmatpush1.bf16.msra.mxu0 0
        %327 = vmatprep.subr.bf16.mxu0 0
        %328 = vmatpush1.bf16.msra.mxu0 0
        %329 = vmatprep.subr.bf16.mxu0 0
        %330 = vmatpush1.bf16.msra.mxu0 0
        %331 = vmatprep.subr.bf16.mxu0 0
        %332 = vmatpush1.bf16.msra.mxu0 0
        %333 = vmatprep.subr.bf16.mxu0 0
        %334 = vmatpush1.bf16.msra.mxu0 0
        %335 = vmatprep.mubr.bf16.mxu0 0
        %336 = vmatmul.mubr.bf16.gmra.mrb[0].mxu0 %v301
        %v337 = vpop.f32.mrb[0].mxu0
        %v338 = vadd.f32 0.0, %v337
        %v339 = vpop.f32.mrb[0].mxu0
        %v340 = vpop.f32.mrb[0].mxu0
        %v341 = vadd.f32 0.0, %v340
        %v342 = vpop.f32.mrb[0].mxu0
        %343 = vdwg.mxu0
        %v344 = vld [vmem:[%s2] sm:$0x1]
        %vm347 = vcmask 1040384
        %v348 = vrot.slane %v338, 7
        %v349 = vrot.slane %v341, 7
        %v350 = vsel %vm347, %v348, %v349
        %v354 = vsel %vm347, %v344, %v348
        %v355 = vld [vmem:[#allocation2] sm:$0xff]
        %v356 = vld [vmem:[#allocation2 + $0x8] sm:$0xff]
        %v357 = vld [vmem:[#allocation2 + $0x10] sm:$0x1]
        %v358 = vadd.f32 %v354, %v355
        %v359 = vadd.f32 %v350, %v356
        %v360 = vadd.f32 %v349, %v357
        %v361 = vld [vmem:[%s4] sm:$0x1]
        %v362 = vld [vmem:[%s5] sm:$0x1]
        %vm363 = vcmask 261120
        %v364 = vsel %vm363, %v358, 0.0
        %365 = vadd.xlane.f32.xlu0 %v364
        %v366 = vpop.xlane.xlu0 %365
        %v367 = vsel %vm363, %v359, 0.0
        %368 = vadd.xlane.f32.xlu0 %v367
        %v369 = vpop.xlane.xlu0 %368
        %vm370 = vcmask 253952
        %v371 = vsel %vm370, %v360, 0.0
        %372 = vadd.xlane.f32.xlu0 %v371
        %v373 = vpop.xlane.xlu0 %372
        %v374 = vrcp.pop 32.0
        %v375 = vmul.f32 %v366, %v374
        %v376 = vmul.f32 %v369, %v374
        %v377 = vmul.f32 %v373, %v374
        %v378 = vsub.f32 %v358, %v375
        %v379 = vsub.f32 %v359, %v376
        %v380 = vsub.f32 %v360, %v377
        %v381 = vmul.f32 %v378, %v378
        %v382 = vmul.f32 %v379, %v379
        %v383 = vmul.f32 %v380, %v380
        %v384 = vsel %vm363, %v381, 0.0
        %385 = vadd.xlane.f32.xlu0 %v384
        %v386 = vpop.xlane.xlu0 %385
        %v387 = vsel %vm363, %v382, 0.0
        %388 = vadd.xlane.f32.xlu0 %v387
        %v389 = vpop.xlane.xlu0 %388
        %v390 = vsel %vm370, %v383, 0.0
        %391 = vadd.xlane.f32.xlu0 %v390
        %v392 = vpop.xlane.xlu0 %391
        %v393 = vmul.f32 %v386, %v374
        %v394 = vmul.f32 %v389, %v374
        %v395 = vmul.f32 %v392, %v374
        %v396 = vadd.f32 %v393, 1e-05
        %v397 = vadd.f32 %v394, 1e-05
        %v398 = vadd.f32 %v395, 1e-05
        %v399 = vrsqrt.pop %v396
        %v400 = vrsqrt.pop %v397
        %v401 = vrsqrt.pop %v398
        %v402 = vmul.f32 %v378, %v399
        %v403 = vmul.f32 %v379, %v400
        %v404 = vmul.f32 %v380, %v401
        %v406 = vlaneseq
        %v407 = vshrl.u32 %v406, 7
        %v408 = vsub.s32 0, %v407
        %v409 = vrot.slane %v361, %v408
        %v411 = vmul.f32 %v402, %v409
        %v412 = vmul.f32 %v403, %v409
        %v413 = vmul.f32 %v404, %v409
        %v415 = vlaneseq
        %v416 = vshrl.u32 %v415, 7
        %v417 = vsub.s32 0, %v416
        %v418 = vrot.slane %v362, %v417
        %v420 = vadd.f32 %v411, %v418
        %v421 = vadd.f32 %v412, %v418
        %v422 = vadd.f32 %v413, %v418
        %423 = vst.msk [vmem:[%s266] sm:$0xff] %vm363, %v420
        %424 = vst.msk [vmem:[%s266 + $0x8] sm:$0xff] %vm363, %v421
        %425 = vst.msk [vmem:[%s266 + $0x10] sm:$0x1] %vm370, %v422
        %p426 = scmp.lt.s32.totalorder %s18, 3
        %s427 = scalar_select %p426, %s18, 3
        %s428 = smul.addr %s427, 3
        %s429 = smul.addr %s428, 8
        %s430 = scalar_lea.vmem %s6, %s429
        // Predicated region
        $region49: #{tpu_custom_call.1} parent=43 // pred_check
          %p431 = pneg %p167
        $region50: #{tpu_custom_call.1} parent=43 // pred_check_branch
          %433 = sbr.rel (%p431) target = $region52
        $region51: #{tpu_custom_call.1} parent=43 // pred_region
          _
        $region52: #{tpu_custom_call.1} parent=43 // pred_fallthru
          _
      $region44: #{tpu_custom_call.1} parent=5 // pred_fallthru
        _
      %p434 = scmp.le.s32.totalorder 2, %s13
      // Predicated region
      $region53: #{tpu_custom_call.1} parent=5 // pred_check
        %p435 = pneg %p434
      $region54: #{tpu_custom_call.1} parent=5 // pred_check_branch
        %437 = sbr.rel (%p435) target = $region56
      $region55: #{tpu_custom_call.1} parent=5 // pred_region
        %s438 = ssub.s32 %s13, 2
        // Predicated region
        $region57: #{tpu_custom_call.1} parent=55 // pred_check
          %p439 = pneg %p173
        $region58: #{tpu_custom_call.1} parent=55 // pred_check_branch
          %441 = sbr.rel (%p439) target = $region60
        $region59: #{tpu_custom_call.1} parent=55 // pred_region
          %p442 = scmp.lt.s32.totalorder %s19, 3
          %s443 = scalar_select %p442, %s19, 3
          %s444 = smul.addr %s443, 3
          %s445 = smul.addr %s444, 8
          %s446 = scalar_lea.vmem %s6, %s445
        $region60: #{tpu_custom_call.1} parent=55 // pred_fallthru
          _
      $region56: #{tpu_custom_call.1} parent=5 // pred_fallthru
        _
    $region6: #{tpu_custom_call.1} parent=1 // loop_footer
      %s17 = sadd.s32 1, %s13
    $region7: #{tpu_custom_call.1} parent=1 // loop_footer_branch
      %12 = sbr.rel target = $region3
    $region8: #{tpu_custom_call.1} parent=1 // loop_exit
      _
    %447 = vsyncpa [#allocation3], 1
    %s448 = scalar_lea.sflag [#allocation3], 1
    %449 = vsyncpa %s448, 1

</llo_original>
